<compile_context>
chip_gen: v6e
topology: v6e:2x2x1
jax: 0.10.0
libtpu: 0.0.40
codegen_flags: <defaults>
</compile_context>

<pallas_src>
import functools

import jax
import jax.numpy as jnp
from jax.experimental import pallas as pl
from jax.experimental.pallas import tpu as pltpu

_LANE = 128
_SUBLANE = 8


def _round_up(x, m):
    return (x + m - 1) // m * m


def classifier_kernel(x_ref, w1_ref, b1_ref, w2_ref, b2_ref, out_ref):
    """One batch tile: out = relu(x @ w1 + b1) @ w2 + b2 (compact C-wide store)."""
    x = x_ref[...]                        # (tm, K) f32, K tiny (=input_size)
    w1 = w1_ref[...]                      # (K, H_PAD)
    K = x.shape[1]
    C = out_ref.shape[1]                  # true num_classes (compact output)

    if K <= 8:
        # fc1 on the VPU: unrolled broadcast mul-add chain, bias folded into
        # the accumulator init (saves one full (tm, H_PAD) add pass).
        acc = b1_ref[...] + x[:, 0:1] * w1[0:1, :]
        for k in range(1, K):
            acc = acc + x[:, k:k + 1] * w1[k:k + 1, :]
    else:
        acc = jnp.dot(x, w1, preferred_element_type=jnp.float32) + b1_ref[...]

    h = jnp.maximum(acc, 0.0)             # (tm, H_PAD), ReLU

    # fc2 on the MXU with lane-dense padded w2/b2; store only the real lanes.
    out = jnp.dot(h, w2_ref[...], preferred_element_type=jnp.float32)
    out = out + b2_ref[...]                # (tm, C_PAD)
    out_ref[...] = out[:, :C].astype(out_ref.dtype)


def prepare_params(w1, b1, w2, b2):
    """One-time parameter prep: pad hidden / class dims to 128 lanes.

    w1: (input_size, hidden); b1: (hidden,) or (1, hidden);
    w2: (hidden, num_classes); b2: (num_classes,) or (1, num_classes).
    Returns (w1_p, b1_p, w2_p, b2_p, num_classes).
    """
    K, H = w1.shape
    C = w2.shape[1]
    H_PAD = _round_up(H, _LANE)
    C_PAD = _round_up(C, _LANE)
    b1 = jnp.reshape(jnp.asarray(b1, jnp.float32), (1, H))
    b2 = jnp.reshape(jnp.asarray(b2, jnp.float32), (1, C))
    w1_p = jnp.zeros((K, H_PAD), jnp.float32).at[:, :H].set(w1)
    b1_p = jnp.zeros((1, H_PAD), jnp.float32).at[:, :H].set(b1)
    w2_p = jnp.zeros((H_PAD, C_PAD), jnp.float32).at[:H, :C].set(w2)
    b2_p = jnp.zeros((1, C_PAD), jnp.float32).at[:, :C].set(b2)
    return w1_p, b1_p, w2_p, b2_p, C


def _choose_tile_m(B, tile_m):
    """Pick a tile size that splits the 8-aligned batch evenly (waste < 8 rows
    per tile) and gives >= 2 grid steps for large B (dual-TC on v7x)."""
    B8 = _round_up(max(B, 1), _SUBLANE)
    n_tiles = pl.cdiv(B8, tile_m)
    if B8 >= 1024:                        # large enough to be worth splitting
        n_tiles = max(n_tiles, 2)
    return _round_up(pl.cdiv(B8, n_tiles), _SUBLANE)


@functools.partial(jax.jit, static_argnames=("num_classes", "tile_m"))
def classifier_forward(x, w1_p, b1_p, w2_p, b2_p, *, num_classes, tile_m=1024):
    """x: (B, input_size) f32; padded params from prepare_params().
    Returns (B, num_classes) f32, matching the PyTorch forward."""
    B, K = x.shape
    H_PAD = w1_p.shape[1]
    C_PAD = w2_p.shape[1]
    C = num_classes

    tm = _choose_tile_m(B, tile_m)
    B_PAD = _round_up(_round_up(B, _SUBLANE), tm)
    x_p = x if B_PAD == B else jnp.pad(x, ((0, B_PAD - B), (0, 0)))

    grid = (B_PAD // tm,)
    out = pl.pallas_call(
        classifier_kernel,
        out_shape=jax.ShapeDtypeStruct((B_PAD, C), jnp.float32),
        grid_spec=pltpu.PrefetchScalarGridSpec(
            num_scalar_prefetch=0,
            grid=grid,
            in_specs=[
                # batch-tiled activations
                pl.BlockSpec((tm, K), lambda i: (i, 0)),
                # weights/biases: constant index_map -> VMEM-resident across steps
                pl.BlockSpec((K, H_PAD), lambda i: (0, 0)),
                pl.BlockSpec((1, H_PAD), lambda i: (0, 0)),
                pl.BlockSpec((H_PAD, C_PAD), lambda i: (0, 0)),
                pl.BlockSpec((1, C_PAD), lambda i: (0, 0)),
            ],
            # compact output: only num_classes lanes are written back to HBM
            out_specs=pl.BlockSpec((tm, C), lambda i: (i, 0)),
        ),
        compiler_params=pltpu.CompilerParams(
            # batch axis is independent -> shard across TensorCores on v7x
            dimension_semantics=("parallel",)),
    )(x_p, w1_p, b1_p, w2_p, b2_p)

    return out if B_PAD == B else out[:B]


def reference_forward(x, w1, b1, w2, b2):
    h = jnp.maximum(x @ w1 + jnp.reshape(b1, (1, -1)), 0.0)
    return h @ w2 + jnp.reshape(b2, (1, -1))


if __name__ == "__main__":
    # Module hyperparameters implied by the PyTorch script.
    input_size = 2
    hidden_size = 64
    num_classes = 8    # len(dataset) is data-dependent; pick a small value
    batch = 8

    key = jax.random.PRNGKey(0)
    k_x, k_w1, k_b1, k_w2, k_b2 = jax.random.split(key, 5)

    # Deterministic synthetic parameters (PyTorch-like uniform init scale).
    x = jax.random.normal(k_x, (batch, input_size), dtype=jnp.float32)
    lim1 = 1.0 / jnp.sqrt(input_size)
    w1 = jax.random.uniform(k_w1, (input_size, hidden_size),
                            minval=-lim1, maxval=lim1, dtype=jnp.float32)
    b1 = jax.random.uniform(k_b1, (1, hidden_size),
                            minval=-lim1, maxval=lim1, dtype=jnp.float32)
    lim2 = 1.0 / jnp.sqrt(hidden_size)
    w2 = jax.random.uniform(k_w2, (hidden_size, num_classes),
                            minval=-lim2, maxval=lim2, dtype=jnp.float32)
    b2 = jax.random.uniform(k_b2, (1, num_classes),
                            minval=-lim2, maxval=lim2, dtype=jnp.float32)

    # One-time parameter prep (padding hoisted out of the forward pass).
    w1_p, b1_p, w2_p, b2_p, C = prepare_params(w1, b1, w2, b2)

    # Small-batch check (the PyTorch-scale case).
    out = classifier_forward(x, w1_p, b1_p, w2_p, b2_p, num_classes=C)
    out = jax.block_until_ready(out)
    ref = reference_forward(x, w1, b1, w2, b2)
    assert out.shape == (batch, num_classes)
    assert jnp.allclose(out, ref, atol=1e-5, rtol=1e-5)

    # Secondary check: non-multiple-of-8 batch exercising the pad/slice path.
    x2 = jax.random.normal(jax.random.PRNGKey(1), (203, input_size), jnp.float32)
    out2 = jax.block_until_ready(
        classifier_forward(x2, w1_p, b1_p, w2_p, b2_p, num_classes=C))
    assert out2.shape == (203, num_classes)
    assert jnp.allclose(out2, reference_forward(x2, w1, b1, w2, b2),
                        atol=1e-5, rtol=1e-5)

    # TODO(synk): ExcelDataset / DataLoader are host-side I/O with no Pallas
    # equivalent; only the Classifier forward pass is implemented as a kernel.
    print("KERNEL_OK")
</pallas_src>

<mosaic_0001>
module attributes {stable_mosaic.version = 11 : i64} {
  func.func @classifier_kernel(%arg0: i32, %arg1: memref<8x2xf32, #tpu.memory_space<vmem>>, %arg2: memref<2x128xf32, #tpu.memory_space<vmem>>, %arg3: memref<1x128xf32, #tpu.memory_space<vmem>>, %arg4: memref<128x128xf32, #tpu.memory_space<vmem>>, %arg5: memref<1x128xf32, #tpu.memory_space<vmem>>, %arg6: memref<8x8xf32, #tpu.memory_space<vmem>>) attributes {dimension_semantics = [#tpu.dimension_semantics<parallel>], iteration_bounds = array<i64: 1>, scalar_prefetch = 0 : i64, scratch_operands = 0 : i64, tpu.core_type = #tpu.core_type<tc>, window_params = [{transform_indices = @transform_0, window_bounds = array<i64: 8, 2>}, {pipeline_mode = #tpu.pipeline_mode<synchronous>, transform_indices = @transform_1, window_bounds = array<i64: 2, 128>}, {pipeline_mode = #tpu.pipeline_mode<synchronous>, transform_indices = @transform_2, window_bounds = array<i64: 1, 128>}, {pipeline_mode = #tpu.pipeline_mode<synchronous>, transform_indices = @transform_3, window_bounds = array<i64: 128, 128>}, {pipeline_mode = #tpu.pipeline_mode<synchronous>, transform_indices = @transform_4, window_bounds = array<i64: 1, 128>}, {transform_indices = @transform_5, window_bounds = array<i64: 8, 8>}]} {
    %c0 = arith.constant 0 : index
    %c0_0 = arith.constant 0 : index
    %0 = vector.load %arg1[%c0, %c0_0] : memref<8x2xf32, #tpu.memory_space<vmem>>, vector<8x2xf32>
    %c0_1 = arith.constant 0 : index
    %c0_2 = arith.constant 0 : index
    %1 = vector.load %arg2[%c0_1, %c0_2] : memref<2x128xf32, #tpu.memory_space<vmem>>, vector<2x128xf32>
    %c0_3 = arith.constant 0 : index
    %c0_4 = arith.constant 0 : index
    %2 = vector.load %arg3[%c0_3, %c0_4] : memref<1x128xf32, #tpu.memory_space<vmem>>, vector<1x128xf32>
    %3 = vector.extract_strided_slice %0 {offsets = [0, 0], sizes = [8, 1], strides = [1, 1]} : vector<8x2xf32> to vector<8x1xf32>
    %4 = vector.extract_strided_slice %1 {offsets = [0, 0], sizes = [1, 128], strides = [1, 1]} : vector<2x128xf32> to vector<1x128xf32>
    %5 = vector.broadcast %3 : vector<8x1xf32> to vector<8x128xf32>
    %6 = vector.broadcast %4 : vector<1x128xf32> to vector<8x128xf32>
    %7 = arith.mulf %5, %6 : vector<8x128xf32>
    %8 = vector.broadcast %2 : vector<1x128xf32> to vector<8x128xf32>
    %9 = arith.addf %8, %7 : vector<8x128xf32>
    %10 = vector.extract_strided_slice %0 {offsets = [0, 1], sizes = [8, 1], strides = [1, 1]} : vector<8x2xf32> to vector<8x1xf32>
    %11 = vector.extract_strided_slice %1 {offsets = [1, 0], sizes = [1, 128], strides = [1, 1]} : vector<2x128xf32> to vector<1x128xf32>
    %12 = vector.broadcast %10 : vector<8x1xf32> to vector<8x128xf32>
    %13 = vector.broadcast %11 : vector<1x128xf32> to vector<8x128xf32>
    %14 = arith.mulf %12, %13 : vector<8x128xf32>
    %15 = arith.addf %9, %14 : vector<8x128xf32>
    %cst = arith.constant 0.000000e+00 : f32
    %16 = vector.broadcast %cst : f32 to vector<8x128xf32>
    %17 = arith.maximumf %15, %16 : vector<8x128xf32>
    %c0_5 = arith.constant 0 : index
    %c0_6 = arith.constant 0 : index
    %18 = vector.load %arg4[%c0_5, %c0_6] : memref<128x128xf32, #tpu.memory_space<vmem>>, vector<128x128xf32>
    %cst_7 = arith.constant dense<0.000000e+00> : vector<8x128xf32>
    %19 = tpu.matmul %17, %18, %cst_7 {dimension_numbers = #tpu.dot_dimension_numbers<[1], [0], [0], [1], [0, 0, 1, 1], [], []>} : vector<8x128xf32>, vector<128x128xf32>, vector<8x128xf32> -> vector<8x128xf32>
    %c0_8 = arith.constant 0 : index
    %c0_9 = arith.constant 0 : index
    %20 = vector.load %arg5[%c0_8, %c0_9] : memref<1x128xf32, #tpu.memory_space<vmem>>, vector<1x128xf32>
    %21 = vector.broadcast %20 : vector<1x128xf32> to vector<8x128xf32>
    %22 = arith.addf %19, %21 : vector<8x128xf32>
    %23 = vector.extract_strided_slice %22 {offsets = [0, 0], sizes = [8, 8], strides = [1, 1]} : vector<8x128xf32> to vector<8x8xf32>
    %c0_10 = arith.constant 0 : index
    %c0_11 = arith.constant 0 : index
    %24 = vector.load %arg6[%c0_10, %c0_11] : memref<8x8xf32, #tpu.memory_space<vmem>>, vector<8x8xf32>
    tpu.vector_store %arg6[%c0_10, %c0_11], %23 {strides = array<i32>} : memref<8x8xf32, #tpu.memory_space<vmem>>, vector<8x8xf32>,
    return
  }
  func.func @transform_0(%arg0: i32) -> (i32, i32) {
    %c0_i32 = arith.constant 0 : i32
    %c0_i32_0 = arith.constant 0 : i32
    return %arg0, %c0_i32 : i32, i32
  }
  func.func @transform_1(%arg0: i32) -> (i32, i32) {
    %c0_i32 = arith.constant 0 : i32
    %c0_i32_0 = arith.constant 0 : i32
    %c0_i32_1 = arith.constant 0 : i32
    return %c0_i32, %c0_i32_0 : i32, i32
  }
  func.func @transform_2(%arg0: i32) -> (i32, i32) {
    %c0_i32 = arith.constant 0 : i32
    %c0_i32_0 = arith.constant 0 : i32
    %c0_i32_1 = arith.constant 0 : i32
    return %c0_i32, %c0_i32_0 : i32, i32
  }
  func.func @transform_3(%arg0: i32) -> (i32, i32) {
    %c0_i32 = arith.constant 0 : i32
    %c0_i32_0 = arith.constant 0 : i32
    %c0_i32_1 = arith.constant 0 : i32
    return %c0_i32, %c0_i32_0 : i32, i32
  }
  func.func @transform_4(%arg0: i32) -> (i32, i32) {
    %c0_i32 = arith.constant 0 : i32
    %c0_i32_0 = arith.constant 0 : i32
    %c0_i32_1 = arith.constant 0 : i32
    return %c0_i32, %c0_i32_0 : i32, i32
  }
  func.func @transform_5(%arg0: i32) -> (i32, i32) {
    %c0_i32 = arith.constant 0 : i32
    %c0_i32_0 = arith.constant 0 : i32
    return %arg0, %c0_i32 : i32, i32
  }
}

</mosaic_0001>

<llo_original>
// kernel: classifier_forward.1
$region0: #{classifier_forward.1}
  #allocation0 [shape = 'u32[]', space=smem, size = 0x4, offset = 0x4, fixed_abs, tag = 'smem constant byte address 0x4 - core index']
  #allocation1 [shape = 'u32[144,128]{1,0:T(1,128)}', space=vmem, size = 0x12000, scoped, tag = 'internal scratch']
  %s0 = inlined_call_operand.vmem [shape: f32[8,2], index: 0, kind: input, shape index: {}]
  %s1 = inlined_call_operand.vmem [shape: f32[2,128], index: 1, kind: input, shape index: {}]
  %s2 = inlined_call_operand.vmem [shape: f32[1,128], index: 2, kind: input, shape index: {}]
  %s3 = inlined_call_operand.hbm [shape: f32[128,128], index: 3, kind: input, shape index: {}]
  %s4 = inlined_call_operand.vmem [shape: f32[1,128], index: 4, kind: input, shape index: {}]
  %s5 = inlined_call_operand.hbm [shape: f32[8,8], index: 5, kind: output, shape index: {}]
  %s6 = sld [smem:[#allocation0]]
  $region34: #{classifier_forward.1} parent=0
    _
  %s8 = ssub.s32 1, %s6
  %s9 = scalar_select 0, %s8, %s6
  $region1: #{classifier_forward.1} parent=0
    #allocation2 [shape = 'u8[65536]{0}', space=vmem, size = 0x10000, scoped, tag = 'input window, operand 3, single buffered']
    #allocation3 [shape = 's32[1]{0}', space=sflag, size = 0x4, scoped, tag = 'scoped memory for classifier_forward.1']
    #allocation4 [shape = 's32[1]{0}', space=sflag, size = 0x4, scoped, tag = 'scoped memory for classifier_forward.1']
    #allocation5 [shape = 'u8[4096]{0}', space=vmem, size = 0x1000, scoped, tag = 'output window, operand 0, single buffered']
    %10 = vsyncpa [#allocation3], 0
    %11 = vsyncpa [#allocation4], 0
    // Predicated region
    $region2: #{classifier_forward.1} parent=1 // pred_check
      _
    $region3: #{classifier_forward.1} parent=1 // pred_check_branch
      %13 = sbr.rel (0) target = $region5
    $region4: #{classifier_forward.1} parent=1 // pred_region
      _
    $region5: #{classifier_forward.1} parent=1 // pred_fallthru
      _
    // Predicated region
    $region6: #{classifier_forward.1} parent=1 // pred_check
      _
    $region7: #{classifier_forward.1} parent=1 // pred_check_branch
      %15 = sbr.rel (0) target = $region9
    $region8: #{classifier_forward.1} parent=1 // pred_region
      _
    $region9: #{classifier_forward.1} parent=1 // pred_fallthru
      _
    // Predicated region
    $region10: #{classifier_forward.1} parent=1 // pred_check
      _
    $region11: #{classifier_forward.1} parent=1 // pred_check_branch
      %17 = sbr.rel (0) target = $region13
    $region12: #{classifier_forward.1} parent=1 // pred_region
      _
    $region13: #{classifier_forward.1} parent=1 // pred_fallthru
      _
    // Predicated region
    $region14: #{classifier_forward.1} parent=1 // pred_check
      _
    $region15: #{classifier_forward.1} parent=1 // pred_check_branch
      %19 = sbr.rel (0) target = $region17
    $region16: #{classifier_forward.1} parent=1 // pred_region
      %s21 = ssub.s32 2048, 2048
      %22 = vsyncadd [#allocation3], %s21
      %s23 = sshll.u32 [#allocation2], 4
      %s24 = int_to_ptr.vmem [resolvable:$true] %s23
      %29 = dma.hbm_to_vmem [thread:$0]  %s3, 2048, %s24, [#allocation3], 128, 128, 8
    $region17: #{classifier_forward.1} parent=1 // pred_fallthru
      _
    // Predicated region
    $region18: #{classifier_forward.1} parent=1 // pred_check
      _
    $region19: #{classifier_forward.1} parent=1 // pred_check_branch
      %31 = sbr.rel (0) target = $region21
    $region20: #{classifier_forward.1} parent=1 // pred_region
      _
    $region21: #{classifier_forward.1} parent=1 // pred_fallthru
      _
    // Predicated region
    $region22: #{classifier_forward.1} parent=1 // pred_check
      _
    $region23: #{classifier_forward.1} parent=1 // pred_check_branch
      %33 = sbr.rel (0) target = $region25
    $region24: #{classifier_forward.1} parent=1 // pred_region
      %34 = dma.done [#allocation3], 2048
    $region25: #{classifier_forward.1} parent=1 // pred_fallthru
      _
    %v35 = vld [vmem:[%s0] sm:$0xff]
    %v36 = vld [vmem:[%s1] sm:$0x3]
    %v37 = vld [vmem:[%s2] sm:$0x1]
    %39 = vset.pattern.permute.xlu0 0
    %40 = vperm.xlu0 %39, %v35
    %v41 = vpop.permute.xlu0 %40
    %v43 = vlaneseq
    %v44 = vshrl.u32 %v43, 7
    %v45 = vsub.s32 0, %v44
    %v46 = vrot.slane %v36, %v45
    %v47 = vmul.f32 %v41, %v46
    %v49 = vlaneseq
    %v50 = vshrl.u32 %v49, 7
    %v51 = vsub.s32 0, %v50
    %v52 = vrot.slane %v37, %v51
    %v54 = vadd.f32 %v52, %v47
    %55 = vset.pattern.permute.xlu0 1
    %56 = vperm.xlu0 %55, %v35
    %v57 = vpop.permute.xlu0 %56
    %v59 = vlaneseq
    %v60 = vshrl.u32 %v59, 7
    %v61 = vsub.s32 1, %v60
    %v62 = vrot.slane %v36, %v61
    %v63 = vmul.f32 %v57, %v62
    %v64 = vadd.f32 %v54, %v63
    %v65 = vmax.f32 %v64, 0.0
    %v66 = vld [vmem:[#allocation2] sm:$0xff]
    %v67 = vld [vmem:[#allocation2 + $0x8] sm:$0xff]
    %v68 = vld [vmem:[#allocation2 + $0x10] sm:$0xff]
    %v69 = vld [vmem:[#allocation2 + $0x18] sm:$0xff]
    %v70 = vld [vmem:[#allocation2 + $0x20] sm:$0xff]
    %v71 = vld [vmem:[#allocation2 + $0x28] sm:$0xff]
    %v72 = vld [vmem:[#allocation2 + $0x30] sm:$0xff]
    %v73 = vld [vmem:[#allocation2 + $0x38] sm:$0xff]
    %v74 = vld [vmem:[#allocation2 + $0x40] sm:$0xff]
    %v75 = vld [vmem:[#allocation2 + $0x48] sm:$0xff]
    %v76 = vld [vmem:[#allocation2 + $0x50] sm:$0xff]
    %v77 = vld [vmem:[#allocation2 + $0x58] sm:$0xff]
    %v78 = vld [vmem:[#allocation2 + $0x60] sm:$0xff]
    %v79 = vld [vmem:[#allocation2 + $0x68] sm:$0xff]
    %v80 = vld [vmem:[#allocation2 + $0x70] sm:$0xff]
    %v81 = vld [vmem:[#allocation2 + $0x78] sm:$0xff]
    %v82 = vld [vmem:[%s4] sm:$0x1]
    %v84 = vlaneseq
    %v85 = vshrl.u32 %v84, 7
    %v86 = vsub.s32 0, %v85
    %v87 = vrot.slane %v82, %v86
    %89 = vmatprep.subr.mxu0 0.0
    %90 = vmatpush1.msra.mxu0 %v81
    %91 = vmatprep.subr.mxu0 0.0
    %92 = vmatpush1.msra.mxu0 %v80
    %93 = vmatprep.subr.mxu0 0.0
    %94 = vmatpush1.msra.mxu0 %v79
    %95 = vmatprep.subr.mxu0 0.0
    %96 = vmatpush1.msra.mxu0 %v78
    %97 = vmatprep.subr.mxu0 0.0
    %98 = vmatpush1.msra.mxu0 %v77
    %99 = vmatprep.subr.mxu0 0.0
    %100 = vmatpush1.msra.mxu0 %v76
    %101 = vmatprep.subr.mxu0 0.0
    %102 = vmatpush1.msra.mxu0 %v75
    %103 = vmatprep.subr.mxu0 0.0
    %104 = vmatpush1.msra.mxu0 %v74
    %105 = vmatprep.subr.mxu0 0.0
    %106 = vmatpush1.msra.mxu0 %v73
    %107 = vmatprep.subr.mxu0 0.0
    %108 = vmatpush1.msra.mxu0 %v72
    %109 = vmatprep.subr.mxu0 0.0
    %110 = vmatpush1.msra.mxu0 %v71
    %111 = vmatprep.subr.mxu0 0.0
    %112 = vmatpush1.msra.mxu0 %v70
    %113 = vmatprep.subr.mxu0 0.0
    %114 = vmatpush1.msra.mxu0 %v69
    %115 = vmatprep.subr.mxu0 0.0
    %116 = vmatpush1.msra.mxu0 %v68
    %117 = vmatprep.subr.mxu0 0.0
    %118 = vmatpush1.msra.mxu0 %v67
    %119 = vmatprep.subr.mxu0 0.0
    %120 = vmatpush1.msra.mxu0 %v66
    %121 = vmatprep.subr.mxu0 0.0
    %122 = vmatpush2.msra.mxu0 0.0
    %123 = vmatprep.subr.mxu0 0.0
    %124 = vmatpush2.msra.mxu0 0.0
    %125 = vmatprep.subr.mxu0 0.0
    %126 = vmatpush2.msra.mxu0 0.0
    %127 = vmatprep.subr.mxu0 0.0
    %128 = vmatpush2.msra.mxu0 0.0
    %129 = vmatprep.subr.mxu0 0.0
    %130 = vmatpush2.msra.mxu0 0.0
    %131 = vmatprep.subr.mxu0 0.0
    %132 = vmatpush2.msra.mxu0 0.0
    %133 = vmatprep.subr.mxu0 0.0
    %134 = vmatpush2.msra.mxu0 0.0
    %135 = vmatprep.subr.mxu0 0.0
    %136 = vmatpush2.msra.mxu0 0.0
    %137 = vmatprep.subr.mxu0 0.0
    %138 = vmatpush2.msra.mxu0 0.0
    %139 = vmatprep.subr.mxu0 0.0
    %140 = vmatpush2.msra.mxu0 0.0
    %141 = vmatprep.subr.mxu0 0.0
    %142 = vmatpush2.msra.mxu0 0.0
    %143 = vmatprep.subr.mxu0 0.0
    %144 = vmatpush2.msra.mxu0 0.0
    %145 = vmatprep.subr.mxu0 0.0
    %146 = vmatpush2.msra.mxu0 0.0
    %147 = vmatprep.subr.mxu0 0.0
    %148 = vmatpush2.msra.mxu0 0.0
    %149 = vmatprep.subr.mxu0 0.0
    %150 = vmatpush2.msra.mxu0 0.0
    %151 = vmatprep.subr.mxu0 0.0
    %152 = vmatpush2.msra.mxu0 0.0
    %153 = vmatprep.mubr.f32.mxu0 0.0
    %154 = vmatmul.mubr.f32.gmra.mxu0 %v65
    %v155 = vpop.f32.mrf.mxu0
    %v156 = vadd.f32 %v87, %v155
    %v157 = vpop.f32.mrf.mxu0
    %158 = vdwg.mxu0
    %vm159 = vcmask 64512
    %160 = vst.msk [vmem:[#allocation5] sm:$0xff] %vm159, %v156
    // Predicated region
    $region26: #{classifier_forward.1} parent=1 // pred_check
      _
    $region27: #{classifier_forward.1} parent=1 // pred_check_branch
      %162 = sbr.rel (0) target = $region29
    $region28: #{classifier_forward.1} parent=1 // pred_region
      %s164 = ssub.s32 128, 128
      %165 = vsyncadd [#allocation4], %s164
      %s167 = sshll.u32 [#allocation5], 4
      %s168 = int_to_ptr.vmem [resolvable:$true] %s167
      %170 = dma.vmem_to_hbm [thread:$0]  %s168, 128, %s5, [#allocation4]
    $region29: #{classifier_forward.1} parent=1 // pred_fallthru
      _
    // Predicated region
    $region30: #{classifier_forward.1} parent=1 // pred_check
      _
    $region31: #{classifier_forward.1} parent=1 // pred_check_branch
      %172 = sbr.rel (0) target = $region33
    $region32: #{classifier_forward.1} parent=1 // pred_region
      %173 = dma.done [#allocation4], 128
    $region33: #{classifier_forward.1} parent=1 // pred_fallthru
      _
    %174 = vsyncpa [#allocation3], 1
    %175 = vsyncpa [#allocation4], 1

</llo_original>
